<compile_context>
chip_gen: v5e
topology: v5e:2x2
jax: 0.10.0
libtpu: 0.0.40
codegen_flags: <defaults>
</compile_context>

<pallas_src>
import jax
import jax.numpy as jnp
from jax.experimental import pallas as pl
from jax.experimental.pallas import tpu as pltpu

INPUT_DIM = 76
LATENT_DIM = 8
H1 = 32          # en_fc1 / dec_fc2 width
H2 = 16          # en_fc2 / dec_fc1 width (BatchNorm1d(16))
BN_EPS = 1e-5


def _matmul_bias(x_f32, w_ref, b_ref):
    """x @ W + b.  W stored in bf16 (DMA savings), accumulate in f32."""
    w = w_ref[...]
    y = jnp.dot(x_f32.astype(w.dtype), w, preferred_element_type=jnp.float32)
    return y + b_ref[...]


def _batchnorm_train(y):
    """PyTorch BatchNorm1d, training mode, gamma=1 / beta=0.
    Single-pass stats: biased var = E[y^2] - mean^2."""
    mean = jnp.mean(y, axis=0, keepdims=True)
    mean_sq = jnp.mean(y * y, axis=0, keepdims=True)
    var = jnp.maximum(mean_sq - mean * mean, 0.0)
    return (y - mean) * jax.lax.rsqrt(var + BN_EPS)


def vae_kernel(x_ref, eps_ref,
               w_e1, b_e1, w_e2, b_e2, w_mu, b_mu, w_lv, b_lv,
               w_d1, b_d1, w_d2, b_d2, w_d3, b_d3,
               o_ref, z_ref, mn_ref, lv_ref):
    x = x_ref[...].astype(jnp.float32)

    # ---- encoder ----
    h = jnp.maximum(_matmul_bias(x, w_e1, b_e1), 0.0)                        # (B, 32)
    h = _batchnorm_train(jnp.maximum(_matmul_bias(h, w_e2, b_e2), 0.0))      # (B, 16)
    mn = _matmul_bias(h, w_mu, b_mu)                                          # (B, L)
    log_var = _matmul_bias(h, w_lv, b_lv)                                     # (B, L)

    # ---- reparameterization ----
    z = mn + eps_ref[...].astype(jnp.float32) * jnp.exp(0.5 * log_var)        # (B, L)

    # ---- decoder ----
    d = _batchnorm_train(jnp.maximum(_matmul_bias(z, w_d1, b_d1), 0.0))       # (B, 16)
    d = jnp.maximum(_matmul_bias(d, w_d2, b_d2), 0.0)                         # (B, 32)
    o_ref[...] = _matmul_bias(d, w_d3, b_d3)                                  # (B, input_dim)

    z_ref[...] = z
    mn_ref[...] = mn
    lv_ref[...] = log_var


def init_params(key):
    """PyTorch nn.Linear default init: uniform(+-1/sqrt(fan_in)).
    Weights stored (in_features, out_features) in bf16; biases (1, out) in f32."""
    dims = [(INPUT_DIM, H1), (H1, H2), (H2, LATENT_DIM), (H2, LATENT_DIM),
            (LATENT_DIM, H2), (H2, H1), (H1, INPUT_DIM)]
    params = []
    for fan_in, fan_out in dims:
        key, kw, kb = jax.random.split(key, 3)
        bound = 1.0 / float(fan_in) ** 0.5
        w = jax.random.uniform(kw, (fan_in, fan_out), jnp.float32, -bound, bound)
        b = jax.random.uniform(kb, (1, fan_out), jnp.float32, -bound, bound)
        params += [w.astype(jnp.bfloat16), b]
    return params


def _cost_estimate(batch):
    mm = (INPUT_DIM * H1 + H1 * H2 + 2 * H2 * LATENT_DIM
          + LATENT_DIM * H2 + H2 * H1 + H1 * INPUT_DIM)
    n_weights = mm
    n_biases = H1 + H2 + 2 * LATENT_DIM + H2 + H1 + INPUT_DIM
    io = batch * (INPUT_DIM + LATENT_DIM            # x, eps in
                  + INPUT_DIM + 3 * LATENT_DIM)     # o, z, mn, log_var out
    return pl.CostEstimate(
        flops=2 * batch * mm,
        transcendentals=batch * LATENT_DIM + 4 * H2,   # exp + BN rsqrt
        bytes_accessed=2 * n_weights + 4 * n_biases + 4 * io,
    )


@jax.jit
def vae_forward(x, eps, params):
    B = x.shape[0]
    vmem = pl.BlockSpec(memory_space=pltpu.MemorySpace.VMEM)
    out_shapes = (
        jax.ShapeDtypeStruct((B, INPUT_DIM), jnp.float32),   # o
        jax.ShapeDtypeStruct((B, LATENT_DIM), jnp.float32),  # z
        jax.ShapeDtypeStruct((B, LATENT_DIM), jnp.float32),  # mn
        jax.ShapeDtypeStruct((B, LATENT_DIM), jnp.float32),  # log_var
    )
    return pl.pallas_call(
        vae_kernel,
        out_shape=out_shapes,
        in_specs=[vmem] * (2 + len(params)),
        out_specs=[vmem] * 4,
        compiler_params=pltpu.CompilerParams(vmem_limit_bytes=16 << 20),
        cost_estimate=_cost_estimate(B),
    )(x, eps, *params)


def reference_forward(x, eps, params):
    """Pure-JAX f32 reference (bf16 weights upcast to f32)."""
    (w_e1, b_e1, w_e2, b_e2, w_mu, b_mu, w_lv, b_lv,
     w_d1, b_d1, w_d2, b_d2, w_d3, b_d3) = [p.astype(jnp.float32) for p in params]

    def bn(y):
        mean = jnp.mean(y, axis=0, keepdims=True)
        var = jnp.mean(jnp.square(y - mean), axis=0, keepdims=True)  # biased
        return (y - mean) * jax.lax.rsqrt(var + BN_EPS)

    h = jnp.maximum(x @ w_e1 + b_e1, 0.0)
    h = bn(jnp.maximum(h @ w_e2 + b_e2, 0.0))
    mn = h @ w_mu + b_mu
    log_var = h @ w_lv + b_lv
    z = mn + eps * jnp.exp(0.5 * log_var)
    d = bn(jnp.maximum(z @ w_d1 + b_d1, 0.0))
    d = jnp.maximum(d @ w_d2 + b_d2, 0.0)
    o = d @ w_d3 + b_d3
    return o, z, mn, log_var


if __name__ == "__main__":
    key = jax.random.PRNGKey(0)
    key, kx, keps, kp = jax.random.split(key, 4)

    B = 8  # multiple of 8 sublanes; > 1 required for training-mode BatchNorm1d
    x = jax.random.normal(kx, (B, INPUT_DIM), dtype=jnp.float32)
    eps = jax.random.normal(keps, (B, LATENT_DIM), dtype=jnp.float32)  # torch.randn_like
    params = init_params(kp)

    outs = vae_forward(x, eps, params)
    outs = jax.block_until_ready(outs)
    o, z, mn, log_var = outs

    assert o.shape == (B, INPUT_DIM), o.shape
    assert z.shape == (B, LATENT_DIM), z.shape
    assert mn.shape == (B, LATENT_DIM), mn.shape
    assert log_var.shape == (B, LATENT_DIM), log_var.shape

    refs = reference_forward(x, eps, params)
    names = ("o", "z", "mn", "log_var")
    for name, got, ref in zip(names, outs, refs):
        err = float(jnp.max(jnp.abs(got - ref)))
        # bf16 matmul inputs in-kernel vs f32 reference -> loose tolerance
        assert err < 5e-2, f"{name} mismatch vs reference: {err}"

    print("KERNEL_OK")
</pallas_src>

<mosaic_0001>
module attributes {stable_mosaic.version = 11 : i64} {
  func.func @vae_kernel(%arg0: memref<8x76xf32, #tpu.memory_space<vmem>>, %arg1: memref<8x8xf32, #tpu.memory_space<vmem>>, %arg2: memref<76x32xbf16, #tpu.memory_space<vmem>>, %arg3: memref<1x32xf32, #tpu.memory_space<vmem>>, %arg4: memref<32x16xbf16, #tpu.memory_space<vmem>>, %arg5: memref<1x16xf32, #tpu.memory_space<vmem>>, %arg6: memref<16x8xbf16, #tpu.memory_space<vmem>>, %arg7: memref<1x8xf32, #tpu.memory_space<vmem>>, %arg8: memref<16x8xbf16, #tpu.memory_space<vmem>>, %arg9: memref<1x8xf32, #tpu.memory_space<vmem>>, %arg10: memref<8x16xbf16, #tpu.memory_space<vmem>>, %arg11: memref<1x16xf32, #tpu.memory_space<vmem>>, %arg12: memref<16x32xbf16, #tpu.memory_space<vmem>>, %arg13: memref<1x32xf32, #tpu.memory_space<vmem>>, %arg14: memref<32x76xbf16, #tpu.memory_space<vmem>>, %arg15: memref<1x76xf32, #tpu.memory_space<vmem>>, %arg16: memref<8x76xf32, #tpu.memory_space<vmem>>, %arg17: memref<8x8xf32, #tpu.memory_space<vmem>>, %arg18: memref<8x8xf32, #tpu.memory_space<vmem>>, %arg19: memref<8x8xf32, #tpu.memory_space<vmem>>) attributes {dimension_semantics = [], scalar_prefetch = 0 : i64, scratch_operands = 0 : i64, tpu.core_type = #tpu.core_type<tc>} {
    %c0 = arith.constant 0 : index
    %c0_0 = arith.constant 0 : index
    %0 = vector.load %arg0[%c0, %c0_0] : memref<8x76xf32, #tpu.memory_space<vmem>>, vector<8x76xf32>
    %c0_1 = arith.constant 0 : index
    %c0_2 = arith.constant 0 : index
    %1 = vector.load %arg2[%c0_1, %c0_2] : memref<76x32xbf16, #tpu.memory_space<vmem>>, vector<76x32xbf16>
    %2 = arith.truncf %0 : vector<8x76xf32> to vector<8x76xbf16>
    %cst = arith.constant dense<0.000000e+00> : vector<8x32xf32>
    %3 = tpu.matmul %2, %1, %cst {dimension_numbers = #tpu.dot_dimension_numbers<[1], [0], [0], [1], [0, 0, 1, 1], [], []>} : vector<8x76xbf16>, vector<76x32xbf16>, vector<8x32xf32> -> vector<8x32xf32>
    %c0_3 = arith.constant 0 : index
    %c0_4 = arith.constant 0 : index
    %4 = vector.load %arg3[%c0_3, %c0_4] : memref<1x32xf32, #tpu.memory_space<vmem>>, vector<1x32xf32>
    %5 = vector.broadcast %4 : vector<1x32xf32> to vector<8x32xf32>
    %6 = arith.addf %3, %5 : vector<8x32xf32>
    %cst_5 = arith.constant 0.000000e+00 : f32
    %7 = vector.broadcast %cst_5 : f32 to vector<8x32xf32>
    %8 = arith.maximumf %6, %7 : vector<8x32xf32>
    %c0_6 = arith.constant 0 : index
    %c0_7 = arith.constant 0 : index
    %9 = vector.load %arg4[%c0_6, %c0_7] : memref<32x16xbf16, #tpu.memory_space<vmem>>, vector<32x16xbf16>
    %10 = arith.truncf %8 : vector<8x32xf32> to vector<8x32xbf16>
    %cst_8 = arith.constant dense<0.000000e+00> : vector<8x16xf32>
    %11 = tpu.matmul %10, %9, %cst_8 {dimension_numbers = #tpu.dot_dimension_numbers<[1], [0], [0], [1], [0, 0, 1, 1], [], []>} : vector<8x32xbf16>, vector<32x16xbf16>, vector<8x16xf32> -> vector<8x16xf32>
    %c0_9 = arith.constant 0 : index
    %c0_10 = arith.constant 0 : index
    %12 = vector.load %arg5[%c0_9, %c0_10] : memref<1x16xf32, #tpu.memory_space<vmem>>, vector<1x16xf32>
    %13 = vector.broadcast %12 : vector<1x16xf32> to vector<8x16xf32>
    %14 = arith.addf %11, %13 : vector<8x16xf32>
    %cst_11 = arith.constant 0.000000e+00 : f32
    %15 = vector.broadcast %cst_11 : f32 to vector<8x16xf32>
    %16 = arith.maximumf %14, %15 : vector<8x16xf32>
    %cst_12 = arith.constant dense<0.000000e+00> : vector<16xf32>
    %17 = vector.multi_reduction <add>, %16, %cst_12 [0] : vector<8x16xf32> to vector<16xf32>
    %18 = vector.shape_cast %17 : vector<16xf32> to vector<1x16xf32>
    %cst_13 = arith.constant 8.000000e+00 : f32
    %19 = vector.broadcast %cst_13 : f32 to vector<1x16xf32>
    %20 = arith.divf %18, %19 : vector<1x16xf32>
    %21 = arith.mulf %16, %16 : vector<8x16xf32>
    %cst_14 = arith.constant dense<0.000000e+00> : vector<16xf32>
    %22 = vector.multi_reduction <add>, %21, %cst_14 [0] : vector<8x16xf32> to vector<16xf32>
    %23 = vector.shape_cast %22 : vector<16xf32> to vector<1x16xf32>
    %cst_15 = arith.constant 8.000000e+00 : f32
    %24 = vector.broadcast %cst_15 : f32 to vector<1x16xf32>
    %25 = arith.divf %23, %24 : vector<1x16xf32>
    %26 = arith.mulf %20, %20 : vector<1x16xf32>
    %27 = arith.subf %25, %26 : vector<1x16xf32>
    %cst_16 = arith.constant 0.000000e+00 : f32
    %28 = vector.broadcast %cst_16 : f32 to vector<1x16xf32>
    %29 = arith.maximumf %27, %28 : vector<1x16xf32>
    %30 = vector.broadcast %20 : vector<1x16xf32> to vector<8x16xf32>
    %31 = arith.subf %16, %30 : vector<8x16xf32>
    %cst_17 = arith.constant 9.99999974E-6 : f32
    %32 = vector.broadcast %cst_17 : f32 to vector<1x16xf32>
    %33 = arith.addf %29, %32 : vector<1x16xf32>
    %34 = math.rsqrt %33 : vector<1x16xf32>
    %35 = vector.broadcast %34 : vector<1x16xf32> to vector<8x16xf32>
    %36 = arith.mulf %31, %35 : vector<8x16xf32>
    %c0_18 = arith.constant 0 : index
    %c0_19 = arith.constant 0 : index
    %37 = vector.load %arg6[%c0_18, %c0_19] : memref<16x8xbf16, #tpu.memory_space<vmem>>, vector<16x8xbf16>
    %38 = arith.truncf %36 : vector<8x16xf32> to vector<8x16xbf16>
    %cst_20 = arith.constant dense<0.000000e+00> : vector<8x8xf32>
    %39 = tpu.matmul %38, %37, %cst_20 {dimension_numbers = #tpu.dot_dimension_numbers<[1], [0], [0], [1], [0, 0, 1, 1], [], []>} : vector<8x16xbf16>, vector<16x8xbf16>, vector<8x8xf32> -> vector<8x8xf32>
    %c0_21 = arith.constant 0 : index
    %c0_22 = arith.constant 0 : index
    %40 = vector.load %arg7[%c0_21, %c0_22] : memref<1x8xf32, #tpu.memory_space<vmem>>, vector<1x8xf32>
    %41 = vector.broadcast %40 : vector<1x8xf32> to vector<8x8xf32>
    %42 = arith.addf %39, %41 : vector<8x8xf32>
    %c0_23 = arith.constant 0 : index
    %c0_24 = arith.constant 0 : index
    %43 = vector.load %arg8[%c0_23, %c0_24] : memref<16x8xbf16, #tpu.memory_space<vmem>>, vector<16x8xbf16>
    %44 = arith.truncf %36 : vector<8x16xf32> to vector<8x16xbf16>
    %cst_25 = arith.constant dense<0.000000e+00> : vector<8x8xf32>
    %45 = tpu.matmul %44, %43, %cst_25 {dimension_numbers = #tpu.dot_dimension_numbers<[1], [0], [0], [1], [0, 0, 1, 1], [], []>} : vector<8x16xbf16>, vector<16x8xbf16>, vector<8x8xf32> -> vector<8x8xf32>
    %c0_26 = arith.constant 0 : index
    %c0_27 = arith.constant 0 : index
    %46 = vector.load %arg9[%c0_26, %c0_27] : memref<1x8xf32, #tpu.memory_space<vmem>>, vector<1x8xf32>
    %47 = vector.broadcast %46 : vector<1x8xf32> to vector<8x8xf32>
    %48 = arith.addf %45, %47 : vector<8x8xf32>
    %c0_28 = arith.constant 0 : index
    %c0_29 = arith.constant 0 : index
    %49 = vector.load %arg1[%c0_28, %c0_29] : memref<8x8xf32, #tpu.memory_space<vmem>>, vector<8x8xf32>
    %cst_30 = arith.constant 5.000000e-01 : f32
    %50 = vector.broadcast %cst_30 : f32 to vector<8x8xf32>
    %51 = arith.mulf %50, %48 : vector<8x8xf32>
    %52 = math.exp %51 : vector<8x8xf32>
    %53 = arith.mulf %49, %52 : vector<8x8xf32>
    %54 = arith.addf %42, %53 : vector<8x8xf32>
    %c0_31 = arith.constant 0 : index
    %c0_32 = arith.constant 0 : index
    %55 = vector.load %arg10[%c0_31, %c0_32] : memref<8x16xbf16, #tpu.memory_space<vmem>>, vector<8x16xbf16>
    %56 = arith.truncf %54 : vector<8x8xf32> to vector<8x8xbf16>
    %cst_33 = arith.constant dense<0.000000e+00> : vector<8x16xf32>
    %57 = tpu.matmul %56, %55, %cst_33 {dimension_numbers = #tpu.dot_dimension_numbers<[1], [0], [0], [1], [0, 0, 1, 1], [], []>} : vector<8x8xbf16>, vector<8x16xbf16>, vector<8x16xf32> -> vector<8x16xf32>
    %c0_34 = arith.constant 0 : index
    %c0_35 = arith.constant 0 : index
    %58 = vector.load %arg11[%c0_34, %c0_35] : memref<1x16xf32, #tpu.memory_space<vmem>>, vector<1x16xf32>
    %59 = vector.broadcast %58 : vector<1x16xf32> to vector<8x16xf32>
    %60 = arith.addf %57, %59 : vector<8x16xf32>
    %cst_36 = arith.constant 0.000000e+00 : f32
    %61 = vector.broadcast %cst_36 : f32 to vector<8x16xf32>
    %62 = arith.maximumf %60, %61 : vector<8x16xf32>
    %cst_37 = arith.constant dense<0.000000e+00> : vector<16xf32>
    %63 = vector.multi_reduction <add>, %62, %cst_37 [0] : vector<8x16xf32> to vector<16xf32>
    %64 = vector.shape_cast %63 : vector<16xf32> to vector<1x16xf32>
    %cst_38 = arith.constant 8.000000e+00 : f32
    %65 = vector.broadcast %cst_38 : f32 to vector<1x16xf32>
    %66 = arith.divf %64, %65 : vector<1x16xf32>
    %67 = arith.mulf %62, %62 : vector<8x16xf32>
    %cst_39 = arith.constant dense<0.000000e+00> : vector<16xf32>
    %68 = vector.multi_reduction <add>, %67, %cst_39 [0] : vector<8x16xf32> to vector<16xf32>
    %69 = vector.shape_cast %68 : vector<16xf32> to vector<1x16xf32>
    %cst_40 = arith.constant 8.000000e+00 : f32
    %70 = vector.broadcast %cst_40 : f32 to vector<1x16xf32>
    %71 = arith.divf %69, %70 : vector<1x16xf32>
    %72 = arith.mulf %66, %66 : vector<1x16xf32>
    %73 = arith.subf %71, %72 : vector<1x16xf32>
    %cst_41 = arith.constant 0.000000e+00 : f32
    %74 = vector.broadcast %cst_41 : f32 to vector<1x16xf32>
    %75 = arith.maximumf %73, %74 : vector<1x16xf32>
    %76 = vector.broadcast %66 : vector<1x16xf32> to vector<8x16xf32>
    %77 = arith.subf %62, %76 : vector<8x16xf32>
    %cst_42 = arith.constant 9.99999974E-6 : f32
    %78 = vector.broadcast %cst_42 : f32 to vector<1x16xf32>
    %79 = arith.addf %75, %78 : vector<1x16xf32>
    %80 = math.rsqrt %79 : vector<1x16xf32>
    %81 = vector.broadcast %80 : vector<1x16xf32> to vector<8x16xf32>
    %82 = arith.mulf %77, %81 : vector<8x16xf32>
    %c0_43 = arith.constant 0 : index
    %c0_44 = arith.constant 0 : index
    %83 = vector.load %arg12[%c0_43, %c0_44] : memref<16x32xbf16, #tpu.memory_space<vmem>>, vector<16x32xbf16>
    %84 = arith.truncf %82 : vector<8x16xf32> to vector<8x16xbf16>
    %cst_45 = arith.constant dense<0.000000e+00> : vector<8x32xf32>
    %85 = tpu.matmul %84, %83, %cst_45 {dimension_numbers = #tpu.dot_dimension_numbers<[1], [0], [0], [1], [0, 0, 1, 1], [], []>} : vector<8x16xbf16>, vector<16x32xbf16>, vector<8x32xf32> -> vector<8x32xf32>
    %c0_46 = arith.constant 0 : index
    %c0_47 = arith.constant 0 : index
    %86 = vector.load %arg13[%c0_46, %c0_47] : memref<1x32xf32, #tpu.memory_space<vmem>>, vector<1x32xf32>
    %87 = vector.broadcast %86 : vector<1x32xf32> to vector<8x32xf32>
    %88 = arith.addf %85, %87 : vector<8x32xf32>
    %cst_48 = arith.constant 0.000000e+00 : f32
    %89 = vector.broadcast %cst_48 : f32 to vector<8x32xf32>
    %90 = arith.maximumf %88, %89 : vector<8x32xf32>
    %c0_49 = arith.constant 0 : index
    %c0_50 = arith.constant 0 : index
    %91 = vector.load %arg14[%c0_49, %c0_50] : memref<32x76xbf16, #tpu.memory_space<vmem>>, vector<32x76xbf16>
    %92 = arith.truncf %90 : vector<8x32xf32> to vector<8x32xbf16>
    %cst_51 = arith.constant dense<0.000000e+00> : vector<8x76xf32>
    %93 = tpu.matmul %92, %91, %cst_51 {dimension_numbers = #tpu.dot_dimension_numbers<[1], [0], [0], [1], [0, 0, 1, 1], [], []>} : vector<8x32xbf16>, vector<32x76xbf16>, vector<8x76xf32> -> vector<8x76xf32>
    %c0_52 = arith.constant 0 : index
    %c0_53 = arith.constant 0 : index
    %94 = vector.load %arg15[%c0_52, %c0_53] : memref<1x76xf32, #tpu.memory_space<vmem>>, vector<1x76xf32>
    %95 = vector.broadcast %94 : vector<1x76xf32> to vector<8x76xf32>
    %96 = arith.addf %93, %95 : vector<8x76xf32>
    %c0_54 = arith.constant 0 : index
    %c0_55 = arith.constant 0 : index
    %97 = vector.load %arg16[%c0_54, %c0_55] : memref<8x76xf32, #tpu.memory_space<vmem>>, vector<8x76xf32>
    tpu.vector_store %arg16[%c0_54, %c0_55], %96 {strides = array<i32>} : memref<8x76xf32, #tpu.memory_space<vmem>>, vector<8x76xf32>,
    %c0_56 = arith.constant 0 : index
    %c0_57 = arith.constant 0 : index
    %98 = vector.load %arg17[%c0_56, %c0_57] : memref<8x8xf32, #tpu.memory_space<vmem>>, vector<8x8xf32>
    tpu.vector_store %arg17[%c0_56, %c0_57], %54 {strides = array<i32>} : memref<8x8xf32, #tpu.memory_space<vmem>>, vector<8x8xf32>,
    %c0_58 = arith.constant 0 : index
    %c0_59 = arith.constant 0 : index
    %99 = vector.load %arg18[%c0_58, %c0_59] : memref<8x8xf32, #tpu.memory_space<vmem>>, vector<8x8xf32>
    tpu.vector_store %arg18[%c0_58, %c0_59], %42 {strides = array<i32>} : memref<8x8xf32, #tpu.memory_space<vmem>>, vector<8x8xf32>,
    %c0_60 = arith.constant 0 : index
    %c0_61 = arith.constant 0 : index
    %100 = vector.load %arg19[%c0_60, %c0_61] : memref<8x8xf32, #tpu.memory_space<vmem>>, vector<8x8xf32>
    tpu.vector_store %arg19[%c0_60, %c0_61], %48 {strides = array<i32>} : memref<8x8xf32, #tpu.memory_space<vmem>>, vector<8x8xf32>,
    return
  }
}

</mosaic_0001>

<llo_original>
// kernel: vae_forward.1
$region0: #{vae_forward.1}
  #allocation0 [shape = 'u32[]', space=smem, size = 0x4, offset = 0x4, fixed_abs, tag = 'smem constant byte address 0x4 - core index']
  #allocation1 [shape = 'u32[72,128]{1,0:T(1,128)}', space=vmem, size = 0x9000, scoped, tag = 'internal scratch']
  %s0 = inlined_call_operand.vmem [shape: f32[8,76], index: 0, kind: input, shape index: {}]
  %s1 = inlined_call_operand.vmem [shape: f32[8,8], index: 1, kind: input, shape index: {}]
  %s2 = inlined_call_operand.vmem [shape: bf16[76,32], index: 2, kind: input, shape index: {}]
  %s3 = inlined_call_operand.vmem [shape: f32[1,32], index: 3, kind: input, shape index: {}]
  %s4 = inlined_call_operand.vmem [shape: bf16[32,16], index: 4, kind: input, shape index: {}]
  %s5 = inlined_call_operand.vmem [shape: f32[1,16], index: 5, kind: input, shape index: {}]
  %s6 = inlined_call_operand.vmem [shape: bf16[16,8], index: 6, kind: input, shape index: {}]
  %s7 = inlined_call_operand.vmem [shape: f32[1,8], index: 7, kind: input, shape index: {}]
  %s8 = inlined_call_operand.vmem [shape: bf16[16,8], index: 8, kind: input, shape index: {}]
  %s9 = inlined_call_operand.vmem [shape: f32[1,8], index: 9, kind: input, shape index: {}]
  %s10 = inlined_call_operand.vmem [shape: bf16[8,16], index: 10, kind: input, shape index: {}]
  %s11 = inlined_call_operand.vmem [shape: f32[1,16], index: 11, kind: input, shape index: {}]
  %s12 = inlined_call_operand.vmem [shape: bf16[16,32], index: 12, kind: input, shape index: {}]
  %s13 = inlined_call_operand.vmem [shape: f32[1,32], index: 13, kind: input, shape index: {}]
  %s14 = inlined_call_operand.vmem [shape: bf16[32,76], index: 14, kind: input, shape index: {}]
  %s15 = inlined_call_operand.vmem [shape: f32[1,76], index: 15, kind: input, shape index: {}]
  %s16 = inlined_call_operand.hbm [shape: f32[8,76], index: 16, kind: output, shape index: {0}]
  %s17 = inlined_call_operand.hbm [shape: f32[8,8], index: 17, kind: output, shape index: {1}]
  %s18 = inlined_call_operand.hbm [shape: f32[8,8], index: 18, kind: output, shape index: {2}]
  %s19 = inlined_call_operand.hbm [shape: f32[8,8], index: 19, kind: output, shape index: {3}]
  %20 = xla_tuple %s16, %s17, %s18, %s19
  %s21 = sld [smem:[#allocation0]]
  $region98: #{vae_forward.1} parent=0
    _
  %s23 = ssub.s32 1, %s21
  %s24 = scalar_select 0, %s23, %s21
  $region1: #{vae_forward.1} parent=0
    #allocation2 [shape = 'u8[4096]{0}', space=vmem, size = 0x1000, scoped, tag = 'output window, operand 0, single buffered']
    #allocation3 [shape = 's32[1]{0}', space=sflag, size = 0x4, scoped, tag = 'scoped memory for vae_forward.1']
    #allocation4 [shape = 'u8[4096]{0}', space=vmem, size = 0x1000, scoped, tag = 'output window, operand 1, single buffered']
    #allocation5 [shape = 's32[1]{0}', space=sflag, size = 0x4, scoped, tag = 'scoped memory for vae_forward.1']
    #allocation6 [shape = 'u8[4096]{0}', space=vmem, size = 0x1000, scoped, tag = 'output window, operand 2, single buffered']
    #allocation7 [shape = 'u8[4096]{0}', space=vmem, size = 0x1000, scoped, tag = 'output window, operand 3, single buffered']
    #allocation8 [shape = 's32[1]{0}', space=sflag, size = 0x4, scoped, tag = 'scoped memory for vae_forward.1']
    %25 = vsyncpa [#allocation3], 0
    %26 = vsyncpa [#allocation5], 0
    %27 = vsyncpa [#allocation8], 0
    // Predicated region
    $region2: #{vae_forward.1} parent=1 // pred_check
      _
    $region3: #{vae_forward.1} parent=1 // pred_check_branch
      %29 = sbr.rel (0) target = $region5
    $region4: #{vae_forward.1} parent=1 // pred_region
      _
    $region5: #{vae_forward.1} parent=1 // pred_fallthru
      _
    // Predicated region
    $region6: #{vae_forward.1} parent=1 // pred_check
      _
    $region7: #{vae_forward.1} parent=1 // pred_check_branch
      %31 = sbr.rel (0) target = $region9
    $region8: #{vae_forward.1} parent=1 // pred_region
      _
    $region9: #{vae_forward.1} parent=1 // pred_fallthru
      _
    // Predicated region
    $region10: #{vae_forward.1} parent=1 // pred_check
      _
    $region11: #{vae_forward.1} parent=1 // pred_check_branch
      %33 = sbr.rel (0) target = $region13
    $region12: #{vae_forward.1} parent=1 // pred_region
      _
    $region13: #{vae_forward.1} parent=1 // pred_fallthru
      _
    // Predicated region
    $region14: #{vae_forward.1} parent=1 // pred_check
      _
    $region15: #{vae_forward.1} parent=1 // pred_check_branch
      %35 = sbr.rel (0) target = $region17
    $region16: #{vae_forward.1} parent=1 // pred_region
      _
    $region17: #{vae_forward.1} parent=1 // pred_fallthru
      _
    // Predicated region
    $region18: #{vae_forward.1} parent=1 // pred_check
      _
    $region19: #{vae_forward.1} parent=1 // pred_check_branch
      %37 = sbr.rel (0) target = $region21
    $region20: #{vae_forward.1} parent=1 // pred_region
      _
    $region21: #{vae_forward.1} parent=1 // pred_fallthru
      _
    // Predicated region
    $region22: #{vae_forward.1} parent=1 // pred_check
      _
    $region23: #{vae_forward.1} parent=1 // pred_check_branch
      %39 = sbr.rel (0) target = $region25
    $region24: #{vae_forward.1} parent=1 // pred_region
      _
    $region25: #{vae_forward.1} parent=1 // pred_fallthru
      _
    // Predicated region
    $region26: #{vae_forward.1} parent=1 // pred_check
      _
    $region27: #{vae_forward.1} parent=1 // pred_check_branch
      %41 = sbr.rel (0) target = $region29
    $region28: #{vae_forward.1} parent=1 // pred_region
      _
    $region29: #{vae_forward.1} parent=1 // pred_fallthru
      _
    // Predicated region
    $region30: #{vae_forward.1} parent=1 // pred_check
      _
    $region31: #{vae_forward.1} parent=1 // pred_check_branch
      %43 = sbr.rel (0) target = $region33
    $region32: #{vae_forward.1} parent=1 // pred_region
      _
    $region33: #{vae_forward.1} parent=1 // pred_fallthru
      _
    // Predicated region
    $region34: #{vae_forward.1} parent=1 // pred_check
      _
    $region35: #{vae_forward.1} parent=1 // pred_check_branch
      %45 = sbr.rel (0) target = $region37
    $region36: #{vae_forward.1} parent=1 // pred_region
      _
    $region37: #{vae_forward.1} parent=1 // pred_fallthru
      _
    // Predicated region
    $region38: #{vae_forward.1} parent=1 // pred_check
      _
    $region39: #{vae_forward.1} parent=1 // pred_check_branch
      %47 = sbr.rel (0) target = $region41
    $region40: #{vae_forward.1} parent=1 // pred_region
      _
    $region41: #{vae_forward.1} parent=1 // pred_fallthru
      _
    // Predicated region
    $region42: #{vae_forward.1} parent=1 // pred_check
      _
    $region43: #{vae_forward.1} parent=1 // pred_check_branch
      %49 = sbr.rel (0) target = $region45
    $region44: #{vae_forward.1} parent=1 // pred_region
      _
    $region45: #{vae_forward.1} parent=1 // pred_fallthru
      _
    // Predicated region
    $region46: #{vae_forward.1} parent=1 // pred_check
      _
    $region47: #{vae_forward.1} parent=1 // pred_check_branch
      %51 = sbr.rel (0) target = $region49
    $region48: #{vae_forward.1} parent=1 // pred_region
      _
    $region49: #{vae_forward.1} parent=1 // pred_fallthru
      _
    // Predicated region
    $region50: #{vae_forward.1} parent=1 // pred_check
      _
    $region51: #{vae_forward.1} parent=1 // pred_check_branch
      %53 = sbr.rel (0) target = $region53
    $region52: #{vae_forward.1} parent=1 // pred_region
      _
    $region53: #{vae_forward.1} parent=1 // pred_fallthru
      _
    // Predicated region
    $region54: #{vae_forward.1} parent=1 // pred_check
      _
    $region55: #{vae_forward.1} parent=1 // pred_check_branch
      %55 = sbr.rel (0) target = $region57
    $region56: #{vae_forward.1} parent=1 // pred_region
      _
    $region57: #{vae_forward.1} parent=1 // pred_fallthru
      _
    // Predicated region
    $region58: #{vae_forward.1} parent=1 // pred_check
      _
    $region59: #{vae_forward.1} parent=1 // pred_check_branch
      %57 = sbr.rel (0) target = $region61
    $region60: #{vae_forward.1} parent=1 // pred_region
      _
    $region61: #{vae_forward.1} parent=1 // pred_fallthru
      _
    // Predicated region
    $region62: #{vae_forward.1} parent=1 // pred_check
      _
    $region63: #{vae_forward.1} parent=1 // pred_check_branch
      %59 = sbr.rel (0) target = $region65
    $region64: #{vae_forward.1} parent=1 // pred_region
      _
    $region65: #{vae_forward.1} parent=1 // pred_fallthru
      _
    %v61 = vld [vmem:[%s0] sm:$0xff]
    %v62 = vld [vmem:[%s2] sm:$0xf]
    %v63 = vld [vmem:[%s2 + $0x4] sm:$0xf]
    %v64 = vld [vmem:[%s2 + $0x8] sm:$0xf]
    %v65 = vld [vmem:[%s2 + $0xc] sm:$0xf]
    %v66 = vld [vmem:[%s2 + $0x10] sm:$0xf]
    %v67 = vld [vmem:[%s2 + $0x14] sm:$0xf]
    %v68 = vld [vmem:[%s2 + $0x18] sm:$0xf]
    %v69 = vld [vmem:[%s2 + $0x1c] sm:$0xf]
    %v70 = vld [vmem:[%s2 + $0x20] sm:$0xf]
    %v71 = vld [vmem:[%s2 + $0x24] sm:$0x3]
    %v72 = vpack.c.bf16 %v61, %v61
    %v73 = vld [vmem:[%s3] sm:$0x1]
    %v75 = vperm.slane %v73, 0
    %v87 = vunpack.c.l.b16 %v62
    %v88 = vunpack.c.l.b16 %v63
    %v89 = vunpack.c.l.b16 %v64
    %v90 = vunpack.c.l.b16 %v65
    %v91 = vunpack.c.l.b16 %v66
    %v92 = vunpack.c.l.b16 %v67
    %v93 = vunpack.c.l.b16 %v68
    %v94 = vunpack.c.l.b16 %v69
    %v95 = vunpack.c.l.b16 %v70
    %v96 = vunpack.c.l.b16 %v71
    %v97 = vpack.c.b16 %v88, %v87
    %v98 = vpack.c.b16 %v90, %v89
    %v99 = vpack.c.b16 %v92, %v91
    %v100 = vpack.c.b16 %v94, %v93
    %v101 = vpack.c.b16 %v96, %v95
    %vm106 = vcmask 621568
    %v108 = vsel %vm106, %v72, 0
    %vm110 = vcmask 1045504
    %v112 = vsel %vm110, %v101, 0
    %114 = vmatpush.bf16.msra.mxu0 0
    %115 = vmatpush.bf16.msra.mxu0 0
    %116 = vmatpush.bf16.msra.mxu0 0
    %117 = vmatpush.bf16.msra.mxu0 %v112
    %118 = vmatpush.bf16.msra.mxu0 %v100
    %119 = vmatpush.bf16.msra.mxu0 %v99
    %120 = vmatpush.bf16.msra.mxu0 %v98
    %121 = vmatpush.bf16.msra.mxu0 %v97
    %122 = vmatmul.bf16.gmra.mxu0 %v108
    %v123 = vpop.f32.mrf.mxu0
    %v124 = vadd.f32 %v75, %v123
    %v125 = vpop.f32.mrf.mxu0
    %126 = vdwg.mxu0
    %v127 = vmax.f32 %v124, 0.0
    %v128 = vld [vmem:[%s4] sm:$0xf]
    %v129 = vld [vmem:[%s4 + $0x4] sm:$0xf]
    %v130 = vld [vmem:[%s4 + $0x8] sm:$0xf]
    %v131 = vld [vmem:[%s4 + $0xc] sm:$0xf]
    %v132 = vpack.c.bf16 %v127, %v127
    %v133 = vld [vmem:[%s5] sm:$0x1]
    %v135 = vperm.slane %v133, 0
    %v141 = vunpack.c.l.b16 %v128
    %v142 = vunpack.c.l.b16 %v129
    %v143 = vunpack.c.l.b16 %v130
    %v144 = vunpack.c.l.b16 %v131
    %v145 = vpack.c.b16 %v142, %v141
    %v146 = vpack.c.b16 %v144, %v143
    %vm149 = vcmask 261120
    %v151 = vsel %vm149, %v132, 0
    %153 = vmatpush.bf16.msra.mxu0 0
    %154 = vmatpush.bf16.msra.mxu0 0
    %155 = vmatpush.bf16.msra.mxu0 0
    %156 = vmatpush.bf16.msra.mxu0 0
    %157 = vmatpush.bf16.msra.mxu0 0
    %158 = vmatpush.bf16.msra.mxu0 0
    %159 = vmatpush.bf16.msra.mxu0 %v146
    %160 = vmatpush.bf16.msra.mxu0 %v145
    %161 = vmatmul.bf16.gmra.mxu0 %v151
    %v162 = vpop.f32.mrf.mxu0
    %v163 = vadd.f32 %v135, %v162
    %v164 = vpop.f32.mrf.mxu0
    %165 = vdwg.mxu0
    %v166 = vmax.f32 %v163, 0.0
    %vm167 = vcmask 130048
    %v168 = vsel %vm167, %v166, 0.0
    %v169 = vrot.slane %v168, 4
    %v170 = vadd.f32 %v168, %v169
    %v171 = vrot.slane %v170, 2
    %v172 = vadd.f32 %v170, %v171
    %v173 = vrot.slane %v172, 1
    %v174 = vadd.f32 %v172, %v173
    %v175 = vrcp.pop 8.0
    %v176 = vmul.f32 8.0, %v175
    %v177 = vsub.f32 1.0, %v176
    %v178 = vmul.f32 %v175, %v177
    %v179 = vadd.f32 %v175, %v178
    %vm180 = vweird.f32 %v175
    %v181 = vsel %vm180, %v175, %v179
    %v182 = vmul.f32 %v174, %v181
    %v183 = vmul.f32 %v166, %v166
    %v184 = vsel %vm167, %v183, 0.0
    %v185 = vrot.slane %v184, 4
    %v186 = vadd.f32 %v184, %v185
    %v187 = vrot.slane %v186, 2
    %v188 = vadd.f32 %v186, %v187
    %v189 = vrot.slane %v188, 1
    %v190 = vadd.f32 %v188, %v189
    %v191 = vmul.f32 %v190, %v181
    %v192 = vmul.f32 %v182, %v182
    %v193 = vsub.f32 %v191, %v192
    %v194 = vmax.f32 %v193, 0.0
    %v195 = vsub.f32 %v166, %v182
    %v196 = vadd.f32 %v194, 1e-05
    %v197 = vrsqrt.pop %v196
    %v198 = vmul.f32 %v197, %v196
    %v199 = vmul.f32 %v198, %v197
    %v200 = vmul.f32 0.5, %v199
    %v201 = vsub.f32 1.5, %v200
    %v202 = vmul.f32 %v197, %v201
    %vm203 = vweird.f32 %v196
    %vm204 = vweird.f32 %v197
    %vm205 = vmor %vm203, %vm204
    %v206 = vsel %vm205, %v197, %v202
    %v207 = vmul.f32 %v195, %v206
    %v208 = vld [vmem:[%s6] sm:$0xf]
    %v209 = vld [vmem:[%s6 + $0x4] sm:$0xf]
    %v210 = vpack.c.bf16 %v207, %v207
    %v211 = vld [vmem:[%s7] sm:$0x1]
    %v213 = vperm.slane %v211, 0
    %v217 = vunpack.c.l.b16 %v208
    %v218 = vunpack.c.l.b16 %v209
    %v219 = vpack.c.b16 %v218, %v217
    %v222 = vsel %vm167, %v210, 0
    %224 = vmatpush.bf16.msra.mxu0 0
    %225 = vmatpush.bf16.msra.mxu0 0
    %226 = vmatpush.bf16.msra.mxu0 0
    %227 = vmatpush.bf16.msra.mxu0 0
    %228 = vmatpush.bf16.msra.mxu0 0
    %229 = vmatpush.bf16.msra.mxu0 0
    %230 = vmatpush.bf16.msra.mxu0 0
    %231 = vmatpush.bf16.msra.mxu0 %v219
    %232 = vmatmul.bf16.gmra.mxu0 %v222
    %v233 = vpop.f32.mrf.mxu0
    %v234 = vadd.f32 %v213, %v233
    %v235 = vpop.f32.mrf.mxu0
    %236 = vdwg.mxu0
    %v237 = vld [vmem:[%s8] sm:$0xf]
    %v238 = vld [vmem:[%s8 + $0x4] sm:$0xf]
    %v239 = vld [vmem:[%s9] sm:$0x1]
    %v241 = vperm.slane %v239, 0
    %v245 = vunpack.c.l.b16 %v237
    %v246 = vunpack.c.l.b16 %v238
    %v247 = vpack.c.b16 %v246, %v245
    %249 = vmatpush.bf16.msra.mxu0 0
    %250 = vmatpush.bf16.msra.mxu0 0
    %251 = vmatpush.bf16.msra.mxu0 0
    %252 = vmatpush.bf16.msra.mxu0 0
    %253 = vmatpush.bf16.msra.mxu0 0
    %254 = vmatpush.bf16.msra.mxu0 0
    %255 = vmatpush.bf16.msra.mxu0 0
    %256 = vmatpush.bf16.msra.mxu0 %v247
    %257 = vmatmul.bf16.gmra.mxu0 %v222
    %v258 = vpop.f32.mrf.mxu0
    %v259 = vadd.f32 %v241, %v258
    %v260 = vpop.f32.mrf.mxu0
    %261 = vdwg.mxu0
    %v262 = vld [vmem:[%s1] sm:$0xff]
    %v263 = vmul.f32 %v259, 0.5
    %v264 = vmul.f32 %v263, 1.442695
    %v265 = vpow.pop %v264
    %v266 = vmul.f32 %v262, %v265
    %v267 = vadd.f32 %v234, %v266
    %v268 = vld [vmem:[%s10] sm:$0xf]
    %v269 = vpack.c.bf16 %v267, %v267
    %v270 = vld [vmem:[%s11] sm:$0x1]
    %v272 = vperm.slane %v270, 0
    %vm274 = vcmask 64512
    %v276 = vsel %vm274, %v269, 0
    %vm278 = vcmask 1043456
    %v280 = vsel %vm278, %v268, 0
    %282 = vmatpush.bf16.msra.mxu0 0
    %283 = vmatpush.bf16.msra.mxu0 0
    %284 = vmatpush.bf16.msra.mxu0 0
    %285 = vmatpush.bf16.msra.mxu0 0
    %286 = vmatpush.bf16.msra.mxu0 0
    %287 = vmatpush.bf16.msra.mxu0 0
    %288 = vmatpush.bf16.msra.mxu0 0
    %289 = vmatpush.bf16.msra.mxu0 %v280
    %290 = vmatmul.bf16.gmra.mxu0 %v276
    %v291 = vpop.f32.mrf.mxu0
    %v292 = vadd.f32 %v272, %v291
    %v293 = vpop.f32.mrf.mxu0
    %294 = vdwg.mxu0
    %v295 = vmax.f32 %v292, 0.0
    %v296 = vsel %vm167, %v295, 0.0
    %v297 = vrot.slane %v296, 4
    %v298 = vadd.f32 %v296, %v297
    %v299 = vrot.slane %v298, 2
    %v300 = vadd.f32 %v298, %v299
    %v301 = vrot.slane %v300, 1
    %v302 = vadd.f32 %v300, %v301
    %v303 = vmul.f32 %v302, %v181
    %v304 = vmul.f32 %v295, %v295
    %v305 = vsel %vm167, %v304, 0.0
    %v306 = vrot.slane %v305, 4
    %v307 = vadd.f32 %v305, %v306
    %v308 = vrot.slane %v307, 2
    %v309 = vadd.f32 %v307, %v308
    %v310 = vrot.slane %v309, 1
    %v311 = vadd.f32 %v309, %v310
    %v312 = vmul.f32 %v311, %v181
    %v313 = vmul.f32 %v303, %v303
    %v314 = vsub.f32 %v312, %v313
    %v315 = vmax.f32 %v314, 0.0
    %v316 = vsub.f32 %v295, %v303
    %v317 = vadd.f32 %v315, 1e-05
    %v318 = vrsqrt.pop %v317
    %v319 = vmul.f32 %v318, %v317
    %v320 = vmul.f32 %v319, %v318
    %v321 = vmul.f32 0.5, %v320
    %v322 = vsub.f32 1.5, %v321
    %v323 = vmul.f32 %v318, %v322
    %vm324 = vweird.f32 %v317
    %vm325 = vweird.f32 %v318
    %vm326 = vmor %vm324, %vm325
    %v327 = vsel %vm326, %v318, %v323
    %v328 = vmul.f32 %v316, %v327
    %v329 = vld [vmem:[%s12] sm:$0xf]
    %v330 = vld [vmem:[%s12 + $0x4] sm:$0xf]
    %v331 = vpack.c.bf16 %v328, %v328
    %v332 = vld [vmem:[%s13] sm:$0x1]
    %v334 = vperm.slane %v332, 0
    %v338 = vunpack.c.l.b16 %v329
    %v339 = vunpack.c.l.b16 %v330
    %v340 = vpack.c.b16 %v339, %v338
    %v343 = vsel %vm167, %v331, 0
    %345 = vmatpush.bf16.msra.mxu0 0
    %346 = vmatpush.bf16.msra.mxu0 0
    %347 = vmatpush.bf16.msra.mxu0 0
    %348 = vmatpush.bf16.msra.mxu0 0
    %349 = vmatpush.bf16.msra.mxu0 0
    %350 = vmatpush.bf16.msra.mxu0 0
    %351 = vmatpush.bf16.msra.mxu0 0
    %352 = vmatpush.bf16.msra.mxu0 %v340
    %353 = vmatmul.bf16.gmra.mxu0 %v343
    %v354 = vpop.f32.mrf.mxu0
    %v355 = vadd.f32 %v334, %v354
    %v356 = vpop.f32.mrf.mxu0
    %357 = vdwg.mxu0
    %v358 = vmax.f32 %v355, 0.0
    %v359 = vld [vmem:[%s14] sm:$0xf]
    %v360 = vld [vmem:[%s14 + $0x4] sm:$0xf]
    %v361 = vld [vmem:[%s14 + $0x8] sm:$0xf]
    %v362 = vld [vmem:[%s14 + $0xc] sm:$0xf]
    %v363 = vpack.c.bf16 %v358, %v358
    %v364 = vld [vmem:[%s15] sm:$0x1]
    %v366 = vperm.slane %v364, 0
    %v372 = vunpack.c.l.b16 %v359
    %v373 = vunpack.c.l.b16 %v360
    %v374 = vunpack.c.l.b16 %v361
    %v375 = vunpack.c.l.b16 %v362
    %v376 = vpack.c.b16 %v373, %v372
    %v377 = vpack.c.b16 %v375, %v374
    %v381 = vsel %vm149, %v363, 0
    %383 = vmatpush.bf16.msra.mxu0 0
    %384 = vmatpush.bf16.msra.mxu0 0
    %385 = vmatpush.bf16.msra.mxu0 0
    %386 = vmatpush.bf16.msra.mxu0 0
    %387 = vmatpush.bf16.msra.mxu0 0
    %388 = vmatpush.bf16.msra.mxu0 0
    %389 = vmatpush.bf16.msra.mxu0 %v377
    %390 = vmatpush.bf16.msra.mxu0 %v376
    %391 = vmatmul.bf16.gmra.mxu0 %v381
    %v392 = vpop.f32.mrf.mxu0
    %v393 = vadd.f32 %v366, %v392
    %v394 = vpop.f32.mrf.mxu0
    %395 = vdwg.mxu0
    %396 = vst.msk [vmem:[#allocation2] sm:$0xff] %vm106, %v393
    %397 = vst.msk [vmem:[#allocation4] sm:$0xff] %vm274, %v267
    %398 = vst.msk [vmem:[#allocation6] sm:$0xff] %vm274, %v234
    %399 = vst.msk [vmem:[#allocation7] sm:$0xff] %vm274, %v259
    // Predicated region
    $region66: #{vae_forward.1} parent=1 // pred_check
      _
    $region67: #{vae_forward.1} parent=1 // pred_check_branch
      %401 = sbr.rel (0) target = $region69
    $region68: #{vae_forward.1} parent=1 // pred_region
      %403 = vsyncadd [#allocation3], 0
      %s405 = sshll.u32 [#allocation2], 4
      %s406 = int_to_ptr.vmem [resolvable:$true] %s405
      %s407 = sshll.u32 %s16, 4
      %s408 = int_to_ptr.hbm [resolvable:$true] %s407
      %410 = dma.vmem_to_hbm [thread:$0]  %s406, 128, %s408, [#allocation3]
    $region69: #{vae_forward.1} parent=1 // pred_fallthru
      _
    // Predicated region
    $region70: #{vae_forward.1} parent=1 // pred_check
      _
    $region71: #{vae_forward.1} parent=1 // pred_check_branch
      %412 = sbr.rel (0) target = $region73
    $region72: #{vae_forward.1} parent=1 // pred_region
      %414 = vsyncadd [#allocation5], 0
      %s416 = sshll.u32 [#allocation4], 4
      %s417 = int_to_ptr.vmem [resolvable:$true] %s416
      %s418 = sshll.u32 %s17, 4
      %s419 = int_to_ptr.hbm [resolvable:$true] %s418
      %421 = dma.vmem_to_hbm [thread:$0]  %s417, 128, %s419, [#allocation5]
    $region73: #{vae_forward.1} parent=1 // pred_fallthru
      _
    // Predicated region
    $region74: #{vae_forward.1} parent=1 // pred_check
      _
    $region75: #{vae_forward.1} parent=1 // pred_check_branch
      %423 = sbr.rel (0) target = $region77
    $region76: #{vae_forward.1} parent=1 // pred_region
      %425 = vsyncadd [#allocation5], 0
      %s427 = sshll.u32 [#allocation6], 4
      %s428 = int_to_ptr.vmem [resolvable:$true] %s427
      %s429 = sshll.u32 %s18, 4
      %s430 = int_to_ptr.hbm [resolvable:$true] %s429
      %432 = dma.vmem_to_hbm [thread:$0]  %s428, 128, %s430, [#allocation5]
    $region77: #{vae_forward.1} parent=1 // pred_fallthru
      _
    // Predicated region
    $region78: #{vae_forward.1} parent=1 // pred_check
      _
    $region79: #{vae_forward.1} parent=1 // pred_check_branch
      %434 = sbr.rel (0) target = $region81
    $region80: #{vae_forward.1} parent=1 // pred_region
      %436 = vsyncadd [#allocation8], 0
      %s438 = sshll.u32 [#allocation7], 4
      %s439 = int_to_ptr.vmem [resolvable:$true] %s438
      %s440 = sshll.u32 %s19, 4
      %s441 = int_to_ptr.hbm [resolvable:$true] %s440
      %443 = dma.vmem_to_hbm [thread:$0]  %s439, 128, %s441, [#allocation8]
    $region81: #{vae_forward.1} parent=1 // pred_fallthru
      _
    // Predicated region
    $region82: #{vae_forward.1} parent=1 // pred_check
      _
    $region83: #{vae_forward.1} parent=1 // pred_check_branch
      %445 = sbr.rel (0) target = $region85
    $region84: #{vae_forward.1} parent=1 // pred_region
      %447 = dma.done [#allocation3], 128
    $region85: #{vae_forward.1} parent=1 // pred_fallthru
      _
    // Predicated region
    $region86: #{vae_forward.1} parent=1 // pred_check
      _
    $region87: #{vae_forward.1} parent=1 // pred_check_branch
      %449 = sbr.rel (0) target = $region89
    $region88: #{vae_forward.1} parent=1 // pred_region
      %451 = dma.done [#allocation5], 128
    $region89: #{vae_forward.1} parent=1 // pred_fallthru
      _
    // Predicated region
    $region90: #{vae_forward.1} parent=1 // pred_check
      _
    $region91: #{vae_forward.1} parent=1 // pred_check_branch
      %453 = sbr.rel (0) target = $region93
    $region92: #{vae_forward.1} parent=1 // pred_region
      %455 = dma.done [#allocation5], 128
    $region93: #{vae_forward.1} parent=1 // pred_fallthru
      _
    // Predicated region
    $region94: #{vae_forward.1} parent=1 // pred_check
      _
    $region95: #{vae_forward.1} parent=1 // pred_check_branch
      %457 = sbr.rel (0) target = $region97
    $region96: #{vae_forward.1} parent=1 // pred_region
      %459 = dma.done [#allocation8], 128
    $region97: #{vae_forward.1} parent=1 // pred_fallthru
      _
    %460 = vsyncpa [#allocation3], 1
    %461 = vsyncpa [#allocation5], 1
    %462 = vsyncpa [#allocation8], 1

</llo_original>
